<compile_context>
chip_gen: v7x
topology: tpu7x:2x2x1
jax: 0.10.0
libtpu: 0.0.40
codegen_flags: <defaults>
</compile_context>

<pallas_src>
import functools

import jax
import jax.numpy as jnp
from jax.experimental import pallas as pl
from jax.experimental.pallas import tpu as pltpu


def _conv_relu_kernel(x_ref, wb_ref, o_ref, *, img_h):
    """Single grid step over the whole (batch-folded) image.

    x_ref : (M, W*Cin)          activations, M = N*H, W and Cin fused on lanes
    wb_ref: (3, W*Cin, W*Cout)  banded weights, one band per vertical tap kh
    o_ref : (M, W*Cout)         output, W and Cout fused (lane-dense store)
    """
    x = x_ref[...]                                   # (M, W*Cin)
    m = x.shape[0]

    # Row masks for the vertical padding=1 (and batch seams after folding):
    # rows with h == 0 have no "row above"; rows with h == H-1 have no
    # "row below".  Tiny (M,1) VPU work, computed once (single grid step).
    row = jax.lax.broadcasted_iota(jnp.int32, (m, 1), 0)
    h_idx = jax.lax.rem(row, img_h)
    not_top = h_idx != 0
    not_bot = h_idx != (img_h - 1)

    # Vertical halo on the XLU (sublane roll) + VPU mask -- no MXU involved.
    # roll(+1): row i gets x[i-1]; roll(M-1): row i gets x[i+1]; the wrapped /
    # cross-batch rows are exactly the masked ones.
    x_above = jnp.where(not_top, pltpu.roll(x, shift=1, axis=0), 0.0)
    x_below = jnp.where(not_bot, pltpu.roll(x, shift=m - 1, axis=0), 0.0)

    # Three banded MXU matmuls (K = W*Cin, N = W*Cout), f32 accumulation.
    # Band kh already contains all three horizontal taps + the W padding.
    acc = jnp.dot(x_above, wb_ref[0], preferred_element_type=jnp.float32)
    acc += jnp.dot(x, wb_ref[1], preferred_element_type=jnp.float32)
    acc += jnp.dot(x_below, wb_ref[2], preferred_element_type=jnp.float32)

    # Fused ReLU, single lane-dense (M, W*Cout) store.
    o_ref[...] = jnp.maximum(acc, 0.0).astype(o_ref.dtype)


def build_band_weights(w_hwio, width):
    """Fold the 3 horizontal taps + padding=1 along W into banded matrices.

    w_hwio: (3, 3, Cin, Cout).  Returns (3, W*Cin, W*Cout) with
      B[kh, p*Cin+ci, j*Cout+co] = w_hwio[kh, (p-j)+1, ci, co] if |p-j| <= 1 else 0
    (p = input column, j = output column).  Do this once at init, not per call.
    """
    kh_, kw_, cin, cout = w_hwio.shape
    assert (kh_, kw_) == (3, 3), "ConvRelu uses a 3x3 kernel"
    p = jnp.arange(width)[:, None]                  # input column
    j = jnp.arange(width)[None, :]                  # output column
    dw = p - j                                      # (W, W)
    valid = (jnp.abs(dw) <= 1).astype(w_hwio.dtype)
    kw_idx = jnp.clip(dw + 1, 0, 2)
    # (3, W, W, Cin, Cout): [kh, p, j, ci, co] = w_hwio[kh, kw_idx[p, j], ci, co]
    bands = w_hwio[:, kw_idx] * valid[None, :, :, None, None]
    bands = jnp.transpose(bands, (0, 1, 3, 2, 4))   # (3, W, Cin, W, Cout)
    return bands.reshape(3, width * cin, width * cout)


def conv_relu_nhwc(x_nhwc, band_w):
    """x_nhwc: (N, H, W, Cin); band_w: (3, W*Cin, W*Cout) from build_band_weights."""
    n, h, w, cin = x_nhwc.shape
    assert band_w.shape[1] == w * cin
    cout = band_w.shape[2] // w

    m = n * h                   # batch folded into the matmul M dimension
    k = w * cin                 # MXU contraction dim
    ncol = w * cout             # lane-dense output width (multiple of 128 here)

    # Free reshape (C innermost, then W, then H, then N): fold batch + fuse
    # W and C onto the lane axis.
    x_flat = x_nhwc.reshape(m, k)

    itemsize = x_nhwc.dtype.itemsize
    cost = pl.CostEstimate(
        flops=2 * 3 * m * k * ncol,
        transcendentals=0,
        bytes_accessed=(m * k + 3 * k * ncol + m * ncol) * itemsize,
    )

    out_flat = pl.pallas_call(
        functools.partial(_conv_relu_kernel, img_h=h),
        out_shape=jax.ShapeDtypeStruct((m, ncol), x_nhwc.dtype),
        grid_spec=pltpu.PrefetchScalarGridSpec(
            num_scalar_prefetch=0,
            grid=(1,),
            in_specs=[
                pl.BlockSpec((m, k), lambda i: (0, 0)),
                pl.BlockSpec((3, k, ncol), lambda i: (0, 0, 0)),
            ],
            out_specs=pl.BlockSpec((m, ncol), lambda i: (0, 0)),
        ),
        compiler_params=pltpu.CompilerParams(
            dimension_semantics=("arbitrary",),
            vmem_limit_bytes=32 * 1024 * 1024,
        ),
        cost_estimate=cost,
    )(x_flat, band_w)

    return out_flat.reshape(n, h, w, cout)


def conv_relu_nchw(x_nchw, w_oihw):
    """PyTorch-convention entry point: x (N, Cin, H, W), w (Cout, Cin, 3, 3).

    The NCHW<->NHWC transposes and the band-weight build are boundary glue for
    the conformance test; in a full model keep activations NHWC end-to-end and
    build the band weights once at module init.
    """
    w_hwio = jnp.transpose(w_oihw, (2, 3, 1, 0))            # OIHW -> HWIO
    band_w = build_band_weights(w_hwio, x_nchw.shape[3])
    x_nhwc = jnp.transpose(x_nchw, (0, 2, 3, 1))
    out_nhwc = conv_relu_nhwc(x_nhwc, band_w)
    return jnp.transpose(out_nhwc, (0, 3, 1, 2))


if __name__ == "__main__":
    key = jax.random.PRNGKey(0)
    kx, kw = jax.random.split(key)

    N, C_IN, C_OUT, H, W = 2, 4, 8, 16, 16

    x = jax.random.normal(kx, (N, C_IN, H, W), dtype=jnp.float32)
    # Deterministic synthetic weights (any deterministic init is fine here).
    fan_in = C_IN * 3 * 3
    bound = 1.0 / (fan_in ** 0.5)
    weight = jax.random.uniform(
        kw, (C_OUT, C_IN, 3, 3), dtype=jnp.float32, minval=-bound, maxval=bound
    )

    out = conv_relu_nchw(x, weight)
    out = jax.block_until_ready(out)

    # Correctness check against XLA's conv (NCHW/OIHW, padding=1) + ReLU.
    ref = jax.lax.conv_general_dilated(
        x, weight, window_strides=(1, 1), padding=((1, 1), (1, 1)),
        dimension_numbers=("NCHW", "OIHW", "NCHW"),
    )
    ref = jnp.maximum(ref, 0.0)
    assert out.shape == (N, C_OUT, H, W)
    assert jnp.allclose(out, ref, atol=2e-5, rtol=2e-5), float(
        jnp.max(jnp.abs(out - ref))
    )

    print("KERNEL_OK")
</pallas_src>

<mosaic_0001>
module attributes {stable_mosaic.version = 11 : i64} {
  func.func @_conv_relu_kernel(%arg0: i32, %arg1: memref<32x64xf32, #tpu.memory_space<vmem>>, %arg2: memref<3x64x128xf32, #tpu.memory_space<vmem>>, %arg3: memref<32x128xf32, #tpu.memory_space<vmem>>) attributes {dimension_semantics = [#tpu.dimension_semantics<arbitrary>], iteration_bounds = array<i64: 1>, scalar_prefetch = 0 : i64, scratch_operands = 0 : i64, tpu.core_type = #tpu.core_type<tc>, window_params = [{pipeline_mode = #tpu.pipeline_mode<synchronous>, transform_indices = @transform_0, window_bounds = array<i64: 32, 64>}, {pipeline_mode = #tpu.pipeline_mode<synchronous>, transform_indices = @transform_1, window_bounds = array<i64: 3, 64, 128>}, {pipeline_mode = #tpu.pipeline_mode<synchronous>, transform_indices = @transform_2, window_bounds = array<i64: 32, 128>}]} {
    %c0 = arith.constant 0 : index
    %c0_0 = arith.constant 0 : index
    %0 = vector.load %arg1[%c0, %c0_0] : memref<32x64xf32, #tpu.memory_space<vmem>>, vector<32x64xf32>
    %1 = tpu.iota {dimensions = array<i32: 0>} : vector<32x1xi32>
    %c16_i32 = arith.constant 16 : i32
    %2 = vector.broadcast %c16_i32 : i32 to vector<32x1xi32>
    %3 = arith.remsi %1, %2 : vector<32x1xi32>
    %c0_i32 = arith.constant 0 : i32
    %4 = vector.broadcast %c0_i32 : i32 to vector<32x1xi32>
    %5 = arith.cmpi ne, %3, %4 : vector<32x1xi32>
    %c15_i32 = arith.constant 15 : i32
    %6 = vector.broadcast %c15_i32 : i32 to vector<32x1xi32>
    %7 = arith.cmpi ne, %3, %6 : vector<32x1xi32>
    %c1_i32 = arith.constant 1 : i32
    %8 = tpu.dynamic_rotate %0 by %c1_i32 dim 0 : vector<32x64xf32>, i32 -> vector<32x64xf32>
    %cst = arith.constant 0.000000e+00 : f32
    %9 = vector.shape_cast %5 : vector<32x1xi1> to vector<32x1xi1>
    %10 = vector.broadcast %9 : vector<32x1xi1> to vector<32x64xi1>
    %11 = vector.broadcast %cst : f32 to vector<32x64xf32>
    %12 = arith.select %10, %8, %11 : vector<32x64xi1>, vector<32x64xf32>
    %c31_i32 = arith.constant 31 : i32
    %13 = tpu.dynamic_rotate %0 by %c31_i32 dim 0 : vector<32x64xf32>, i32 -> vector<32x64xf32>
    %cst_1 = arith.constant 0.000000e+00 : f32
    %14 = vector.shape_cast %7 : vector<32x1xi1> to vector<32x1xi1>
    %15 = vector.broadcast %14 : vector<32x1xi1> to vector<32x64xi1>
    %16 = vector.broadcast %cst_1 : f32 to vector<32x64xf32>
    %17 = arith.select %15, %13, %16 : vector<32x64xi1>, vector<32x64xf32>
    %c0_2 = arith.constant 0 : index
    %c0_3 = arith.constant 0 : index
    %c0_4 = arith.constant 0 : index
    %18 = vector.load %arg2[%c0_2, %c0_3, %c0_4] : memref<3x64x128xf32, #tpu.memory_space<vmem>>, vector<1x64x128xf32>
    %19 = vector.shape_cast %18 : vector<1x64x128xf32> to vector<64x128xf32>
    %cst_5 = arith.constant dense<0.000000e+00> : vector<32x128xf32>
    %20 = tpu.matmul %12, %19, %cst_5 {dimension_numbers = #tpu.dot_dimension_numbers<[1], [0], [0], [1], [0, 0, 1, 1], [], []>} : vector<32x64xf32>, vector<64x128xf32>, vector<32x128xf32> -> vector<32x128xf32>
    %c1 = arith.constant 1 : index
    %c0_6 = arith.constant 0 : index
    %c0_7 = arith.constant 0 : index
    %21 = vector.load %arg2[%c1, %c0_6, %c0_7] : memref<3x64x128xf32, #tpu.memory_space<vmem>>, vector<1x64x128xf32>
    %22 = vector.shape_cast %21 : vector<1x64x128xf32> to vector<64x128xf32>
    %cst_8 = arith.constant dense<0.000000e+00> : vector<32x128xf32>
    %23 = tpu.matmul %0, %22, %cst_8 {dimension_numbers = #tpu.dot_dimension_numbers<[1], [0], [0], [1], [0, 0, 1, 1], [], []>} : vector<32x64xf32>, vector<64x128xf32>, vector<32x128xf32> -> vector<32x128xf32>
    %24 = arith.addf %20, %23 : vector<32x128xf32>
    %c2 = arith.constant 2 : index
    %c0_9 = arith.constant 0 : index
    %c0_10 = arith.constant 0 : index
    %25 = vector.load %arg2[%c2, %c0_9, %c0_10] : memref<3x64x128xf32, #tpu.memory_space<vmem>>, vector<1x64x128xf32>
    %26 = vector.shape_cast %25 : vector<1x64x128xf32> to vector<64x128xf32>
    %cst_11 = arith.constant dense<0.000000e+00> : vector<32x128xf32>
    %27 = tpu.matmul %17, %26, %cst_11 {dimension_numbers = #tpu.dot_dimension_numbers<[1], [0], [0], [1], [0, 0, 1, 1], [], []>} : vector<32x64xf32>, vector<64x128xf32>, vector<32x128xf32> -> vector<32x128xf32>
    %28 = arith.addf %24, %27 : vector<32x128xf32>
    %cst_12 = arith.constant 0.000000e+00 : f32
    %29 = vector.broadcast %cst_12 : f32 to vector<32x128xf32>
    %30 = arith.maximumf %28, %29 : vector<32x128xf32>
    %c0_13 = arith.constant 0 : index
    %c0_14 = arith.constant 0 : index
    %31 = vector.load %arg3[%c0_13, %c0_14] : memref<32x128xf32, #tpu.memory_space<vmem>>, vector<32x128xf32>
    tpu.vector_store %arg3[%c0_13, %c0_14], %30 {strides = array<i32>} : memref<32x128xf32, #tpu.memory_space<vmem>>, vector<32x128xf32>,
    return
  }
  func.func @transform_0(%arg0: i32) -> (i32, i32) {
    %c0_i32 = arith.constant 0 : i32
    %c0_i32_0 = arith.constant 0 : i32
    %c0_i32_1 = arith.constant 0 : i32
    return %c0_i32, %c0_i32_0 : i32, i32
  }
  func.func @transform_1(%arg0: i32) -> (i32, i32, i32) {
    %c0_i32 = arith.constant 0 : i32
    %c0_i32_0 = arith.constant 0 : i32
    %c0_i32_1 = arith.constant 0 : i32
    %c0_i32_2 = arith.constant 0 : i32
    return %c0_i32, %c0_i32_0, %c0_i32_1 : i32, i32, i32
  }
  func.func @transform_2(%arg0: i32) -> (i32, i32) {
    %c0_i32 = arith.constant 0 : i32
    %c0_i32_0 = arith.constant 0 : i32
    %c0_i32_1 = arith.constant 0 : i32
    return %c0_i32, %c0_i32_0 : i32, i32
  }
}

</mosaic_0001>

<llo_original>
// kernel: tpu_custom_call.1
$region0: #{tpu_custom_call.1}
  #allocation0 [shape = 'u32[]', space=smem, size = 0x4, offset = 0x4, fixed_abs, tag = 'smem constant byte address 0x4 - core index']
  #allocation1 [shape = 'u32[144,128]{1,0:T(1,128)}', space=vmem, size = 0x12000, scoped, tag = 'internal scratch']
  %s0 = inlined_call_operand.hbm [shape: f32[32,64], index: 0, kind: input, shape index: {}]
  %s1 = inlined_call_operand.hbm [shape: f32[3,64,128], index: 1, kind: input, shape index: {}]
  %s2 = inlined_call_operand.hbm [shape: f32[32,128], index: 2, kind: output, shape index: {}]
  %s3 = sld [smem:[#allocation0]]
  $region26: #{tpu_custom_call.1} parent=0
    _
  %s5 = ssub.s32 1, %s3
  %s6 = scalar_select 0, %s5, %s3
  $region1: #{tpu_custom_call.1} parent=0
    #allocation2 [shape = 'u8[16384]{0}', space=vmem, size = 0x4000, scoped, tag = 'input window, operand 0, single buffered']
    #allocation3 [shape = 's32[1]{0}', space=sflag, size = 0x4, scoped, tag = 'scoped memory for tpu_custom_call.1']
    #allocation4 [shape = 's32[1]{0}', space=sflag, size = 0x4, scoped, tag = 'scoped memory for tpu_custom_call.1']
    #allocation5 [shape = 'u8[98304]{0}', space=vmem, size = 0x18000, scoped, tag = 'input window, operand 1, single buffered']
    #allocation6 [shape = 's32[1]{0}', space=sflag, size = 0x4, scoped, tag = 'scoped memory for tpu_custom_call.1']
    #allocation7 [shape = 'u8[16384]{0}', space=vmem, size = 0x4000, scoped, tag = 'output window, operand 0, single buffered']
    %7 = vsyncpa [#allocation3], 0
    %8 = vsyncpa [#allocation6], 0
    %9 = vsyncpa [#allocation4], 0
    // Predicated region
    $region2: #{tpu_custom_call.1} parent=1 // pred_check
      _
    $region3: #{tpu_custom_call.1} parent=1 // pred_check_branch
      %11 = sbr.rel (0) target = $region5
    $region4: #{tpu_custom_call.1} parent=1 // pred_region
      %s13 = ssub.s32 512, 512
      %14 = vsyncadd [#allocation3], %s13
      %s15 = sshll.u32 [#allocation2], 4
      %s16 = int_to_ptr.vmem [resolvable:$true] %s15
      %21 = dma.hbm_to_vmem [thread:$0]  %s0, 512, %s16, [#allocation3], 128, 128, 8
    $region5: #{tpu_custom_call.1} parent=1 // pred_fallthru
      _
    // Predicated region
    $region6: #{tpu_custom_call.1} parent=1 // pred_check
      _
    $region7: #{tpu_custom_call.1} parent=1 // pred_check_branch
      %23 = sbr.rel (0) target = $region9
    $region8: #{tpu_custom_call.1} parent=1 // pred_region
      %s25 = ssub.s32 3072, 3072
      %26 = vsyncadd [#allocation6], %s25
      %s27 = sshll.u32 [#allocation5], 4
      %s28 = int_to_ptr.vmem [resolvable:$true] %s27
      %33 = dma.hbm_to_vmem [thread:$0]  %s1, 3072, %s28, [#allocation6], 128, 128, 8
    $region9: #{tpu_custom_call.1} parent=1 // pred_fallthru
      _
    // Predicated region
    $region10: #{tpu_custom_call.1} parent=1 // pred_check
      _
    $region11: #{tpu_custom_call.1} parent=1 // pred_check_branch
      %35 = sbr.rel (0) target = $region13
    $region12: #{tpu_custom_call.1} parent=1 // pred_region
      %36 = dma.done [#allocation3], 512
    $region13: #{tpu_custom_call.1} parent=1 // pred_fallthru
      _
    // Predicated region
    $region14: #{tpu_custom_call.1} parent=1 // pred_check
      _
    $region15: #{tpu_custom_call.1} parent=1 // pred_check_branch
      %38 = sbr.rel (0) target = $region17
    $region16: #{tpu_custom_call.1} parent=1 // pred_region
      %39 = dma.done [#allocation6], 3072
    $region17: #{tpu_custom_call.1} parent=1 // pred_fallthru
      _
    %v40 = vld [vmem:[#allocation2] sm:$0xff]
    %v41 = vld [vmem:[#allocation2 + $0x8] sm:$0xff]
    %v42 = vld [vmem:[#allocation2 + $0x10] sm:$0xff]
    %v43 = vld [vmem:[#allocation2 + $0x18] sm:$0xff]
    %v44 = vlaneseq
    %v45 = vshrl.u32 %v44, 7
    %v46 = vadd.s32 %v45, 8
    %v47 = vadd.s32 %v45, 16
    %v48 = vadd.s32 %v45, 24
    %vm49 = vcmp.lt.s32.totalorder %v45, 0
    %v50 = vsub.s32 0, %v45
    %v51 = vsel %vm49, %v50, %v45
    %v52 = vshrl.u32 %v51, 4
    %v53 = vand.u32 %v51, 15
    %v54 = vsub.s32 0, %v53
    %v55 = vsel %vm49, %v54, %v53
    %vm56 = vcmp.lt.s32.totalorder %v46, 0
    %v57 = vsub.s32 0, %v46
    %v58 = vsel %vm56, %v57, %v46
    %v59 = vshrl.u32 %v58, 4
    %v60 = vand.u32 %v58, 15
    %v61 = vsub.s32 0, %v60
    %v62 = vsel %vm56, %v61, %v60
    %vm63 = vcmp.lt.s32.totalorder %v47, 0
    %v64 = vsub.s32 0, %v47
    %v65 = vsel %vm63, %v64, %v47
    %v66 = vshrl.u32 %v65, 4
    %v67 = vand.u32 %v65, 15
    %v68 = vsub.s32 0, %v67
    %v69 = vsel %vm63, %v68, %v67
    %vm70 = vcmp.lt.s32.totalorder %v48, 0
    %v71 = vsub.s32 0, %v48
    %v72 = vsel %vm70, %v71, %v48
    %v73 = vshrl.u32 %v72, 4
    %v74 = vand.u32 %v72, 15
    %v75 = vsub.s32 0, %v74
    %v76 = vsel %vm70, %v75, %v74
    %vm77 = vcmp.ne.s32.totalorder %v55, 0
    %vm78 = vcmp.ne.s32.totalorder %v62, 0
    %vm79 = vcmp.ne.s32.totalorder %v69, 0
    %vm80 = vcmp.ne.s32.totalorder %v76, 0
    %vm81 = vcmp.ne.s32.totalorder %v55, 15
    %vm82 = vcmp.ne.s32.totalorder %v62, 15
    %vm83 = vcmp.ne.s32.totalorder %v69, 15
    %vm84 = vcmp.ne.s32.totalorder %v76, 15
    %v85 = vrot.slane %v40, 7
    %v86 = vrot.slane %v41, 7
    %v87 = vrot.slane %v42, 7
    %v88 = vrot.slane %v43, 7
    %vm89 = vcmp.lt.s32.totalorder %v45, 1
    %v90 = vsel %vm89, %v87, %v88
    %v91 = vsel %vm89, %v86, %v87
    %v92 = vsel %vm89, %v85, %v86
    %v93 = vsel %vm89, %v88, %v85
    %v94 = vsel %vm77, 1, 0
    %v95 = vsel %vm78, 1, 0
    %v96 = vsel %vm79, 1, 0
    %v97 = vsel %vm80, 1, 0
    %vm98 = vcmp.eq.s32.totalorder %v94, 1
    %vm99 = vcmp.eq.s32.totalorder %v95, 1
    %vm100 = vcmp.eq.s32.totalorder %v96, 1
    %vm101 = vcmp.eq.s32.totalorder %v97, 1
    %v102 = vsel %vm98, %v93, 0.0
    %v103 = vsel %vm99, %v92, 0.0
    %v104 = vsel %vm100, %v91, 0.0
    %v105 = vsel %vm101, %v90, 0.0
    %v106 = vrot.slane %v40, 1
    %v107 = vrot.slane %v41, 1
    %v108 = vrot.slane %v42, 1
    %v109 = vrot.slane %v43, 1
    %vm110 = vcmp.lt.s32.totalorder %v45, 7
    %v111 = vsel %vm110, %v108, %v109
    %v112 = vsel %vm110, %v107, %v108
    %v113 = vsel %vm110, %v106, %v107
    %v114 = vsel %vm110, %v109, %v106
    %v115 = vsel %vm81, 1, 0
    %v116 = vsel %vm82, 1, 0
    %v117 = vsel %vm83, 1, 0
    %v118 = vsel %vm84, 1, 0
    %vm119 = vcmp.eq.s32.totalorder %v115, 1
    %vm120 = vcmp.eq.s32.totalorder %v116, 1
    %vm121 = vcmp.eq.s32.totalorder %v117, 1
    %vm122 = vcmp.eq.s32.totalorder %v118, 1
    %v123 = vsel %vm119, %v113, 0.0
    %v124 = vsel %vm120, %v112, 0.0
    %v125 = vsel %vm121, %v111, 0.0
    %v126 = vsel %vm122, %v114, 0.0
    %v127 = vld [vmem:[#allocation5] sm:$0xff]
    %v128 = vld [vmem:[#allocation5 + $0x8] sm:$0xff]
    %v129 = vld [vmem:[#allocation5 + $0x10] sm:$0xff]
    %v130 = vld [vmem:[#allocation5 + $0x18] sm:$0xff]
    %v131 = vld [vmem:[#allocation5 + $0x20] sm:$0xff]
    %v132 = vld [vmem:[#allocation5 + $0x28] sm:$0xff]
    %v133 = vld [vmem:[#allocation5 + $0x30] sm:$0xff]
    %v134 = vld [vmem:[#allocation5 + $0x38] sm:$0xff]
    %s135 = scalar_lea.vmem [#allocation5], 64
    %v136 = vld [vmem:[%s135] sm:$0xff]
    %v137 = vld [vmem:[%s135 + $0x8] sm:$0xff]
    %v138 = vld [vmem:[%s135 + $0x10] sm:$0xff]
    %v139 = vld [vmem:[%s135 + $0x18] sm:$0xff]
    %v140 = vld [vmem:[%s135 + $0x20] sm:$0xff]
    %v141 = vld [vmem:[%s135 + $0x28] sm:$0xff]
    %v142 = vld [vmem:[%s135 + $0x30] sm:$0xff]
    %v143 = vld [vmem:[%s135 + $0x38] sm:$0xff]
    %vm144 = vcmask 523264
    %v146 = vsel %vm144, %v40, 0
    %v149 = vsel %vm144, %v41, 0
    %v152 = vsel %vm144, %v42, 0
    %v155 = vsel %vm144, %v43, 0
    %157 = vmatprep.subr.mxu0 0.0
    %158 = vmatpush1.msra.mxu0 %v136
    %159 = vmatprep.subr.mxu0 0.0
    %160 = vmatpush1.msra.mxu0 %v137
    %161 = vmatprep.subr.mxu0 0.0
    %162 = vmatpush1.msra.mxu0 %v138
    %163 = vmatprep.subr.mxu0 0.0
    %164 = vmatpush1.msra.mxu0 %v139
    %165 = vmatprep.subr.mxu0 0.0
    %166 = vmatpush1.msra.mxu0 %v140
    %167 = vmatprep.subr.mxu0 0.0
    %168 = vmatpush1.msra.mxu0 %v141
    %169 = vmatprep.subr.mxu0 0.0
    %170 = vmatpush1.msra.mxu0 %v142
    %171 = vmatprep.subr.mxu0 0.0
    %172 = vmatpush1.msra.mxu0 %v143
    %173 = vmatprep.subr.mxu0 0.0
    %174 = vmatpush1.msra.mxu0 0.0
    %175 = vmatprep.subr.mxu0 0.0
    %176 = vmatpush1.msra.mxu0 0.0
    %177 = vmatprep.subr.mxu0 0.0
    %178 = vmatpush1.msra.mxu0 0.0
    %179 = vmatprep.subr.mxu0 0.0
    %180 = vmatpush1.msra.mxu0 0.0
    %181 = vmatprep.subr.mxu0 0.0
    %182 = vmatpush1.msra.mxu0 0.0
    %183 = vmatprep.subr.mxu0 0.0
    %184 = vmatpush1.msra.mxu0 0.0
    %185 = vmatprep.subr.mxu0 0.0
    %186 = vmatpush1.msra.mxu0 0.0
    %187 = vmatprep.subr.mxu0 0.0
    %188 = vmatpush1.msra.mxu0 0.0
    %189 = vmatprep.subr.mxu0 0.0
    %190 = vmatpush1.msra.mxu0 0.0
    %191 = vmatprep.subr.mxu0 0.0
    %192 = vmatpush1.msra.mxu0 0.0
    %193 = vmatprep.subr.mxu0 0.0
    %194 = vmatpush1.msra.mxu0 0.0
    %195 = vmatprep.subr.mxu0 0.0
    %196 = vmatpush1.msra.mxu0 0.0
    %197 = vmatprep.subr.mxu0 0.0
    %198 = vmatpush1.msra.mxu0 0.0
    %199 = vmatprep.subr.mxu0 0.0
    %200 = vmatpush1.msra.mxu0 0.0
    %201 = vmatprep.subr.mxu0 0.0
    %202 = vmatpush1.msra.mxu0 0.0
    %203 = vmatprep.subr.mxu0 0.0
    %204 = vmatpush1.msra.mxu0 0.0
    %205 = vmatprep.subr.mxu0 0.0
    %206 = vmatpush1.msra.mxu0 0.0
    %207 = vmatprep.subr.mxu0 0.0
    %208 = vmatpush1.msra.mxu0 0.0
    %209 = vmatprep.subr.mxu0 0.0
    %210 = vmatpush1.msra.mxu0 0.0
    %211 = vmatprep.subr.mxu0 0.0
    %212 = vmatpush1.msra.mxu0 0.0
    %213 = vmatprep.subr.mxu0 0.0
    %214 = vmatpush1.msra.mxu0 0.0
    %215 = vmatprep.subr.mxu0 0.0
    %216 = vmatpush1.msra.mxu0 0.0
    %217 = vmatprep.subr.mxu0 0.0
    %218 = vmatpush1.msra.mxu0 0.0
    %219 = vmatprep.subr.mxu0 0.0
    %220 = vmatpush1.msra.mxu0 0.0
    %221 = vmatprep.mubr.f32.mxu0 0.0
    %222 = vmatmul.mubr.f32.gmra.mrb[0].mxu0 %v146
    %v223 = vpop.f32.mrb[0].mxu0
    %v224 = vadd.f32 0.0, %v223
    %v225 = vpop.f32.mrb[0].mxu0
    %226 = vmatprep.mubr.f32.mxu0 0.0
    %227 = vmatmul.mubr.f32.gmra.mrb[0].mxu0 %v149
    %v228 = vpop.f32.mrb[0].mxu0
    %v229 = vadd.f32 0.0, %v228
    %v230 = vpop.f32.mrb[0].mxu0
    %231 = vmatprep.mubr.f32.mxu0 0.0
    %232 = vmatmul.mubr.f32.gmra.mrb[0].mxu0 %v152
    %v233 = vpop.f32.mrb[0].mxu0
    %v234 = vadd.f32 0.0, %v233
    %v235 = vpop.f32.mrb[0].mxu0
    %236 = vmatprep.mubr.f32.mxu0 0.0
    %237 = vmatmul.mubr.f32.gmra.mrb[0].mxu0 %v155
    %v238 = vpop.f32.mrb[0].mxu0
    %v239 = vadd.f32 0.0, %v238
    %v240 = vpop.f32.mrb[0].mxu0
    %241 = vdwg.mxu0
    %v243 = vsel %vm144, %v102, 0
    %v246 = vsel %vm144, %v103, 0
    %v249 = vsel %vm144, %v104, 0
    %v252 = vsel %vm144, %v105, 0
    %254 = vmatprep.subr.mxu0 0.0
    %255 = vmatpush1.msra.mxu0 %v127
    %256 = vmatprep.subr.mxu0 0.0
    %257 = vmatpush1.msra.mxu0 %v128
    %258 = vmatprep.subr.mxu0 0.0
    %259 = vmatpush1.msra.mxu0 %v129
    %260 = vmatprep.subr.mxu0 0.0
    %261 = vmatpush1.msra.mxu0 %v130
    %262 = vmatprep.subr.mxu0 0.0
    %263 = vmatpush1.msra.mxu0 %v131
    %264 = vmatprep.subr.mxu0 0.0
    %265 = vmatpush1.msra.mxu0 %v132
    %266 = vmatprep.subr.mxu0 0.0
    %267 = vmatpush1.msra.mxu0 %v133
    %268 = vmatprep.subr.mxu0 0.0
    %269 = vmatpush1.msra.mxu0 %v134
    %270 = vmatprep.subr.mxu0 0.0
    %271 = vmatpush1.msra.mxu0 0.0
    %272 = vmatprep.subr.mxu0 0.0
    %273 = vmatpush1.msra.mxu0 0.0
    %274 = vmatprep.subr.mxu0 0.0
    %275 = vmatpush1.msra.mxu0 0.0
    %276 = vmatprep.subr.mxu0 0.0
    %277 = vmatpush1.msra.mxu0 0.0
    %278 = vmatprep.subr.mxu0 0.0
    %279 = vmatpush1.msra.mxu0 0.0
    %280 = vmatprep.subr.mxu0 0.0
    %281 = vmatpush1.msra.mxu0 0.0
    %282 = vmatprep.subr.mxu0 0.0
    %283 = vmatpush1.msra.mxu0 0.0
    %284 = vmatprep.subr.mxu0 0.0
    %285 = vmatpush1.msra.mxu0 0.0
    %286 = vmatprep.subr.mxu0 0.0
    %287 = vmatpush1.msra.mxu0 0.0
    %288 = vmatprep.subr.mxu0 0.0
    %289 = vmatpush1.msra.mxu0 0.0
    %290 = vmatprep.subr.mxu0 0.0
    %291 = vmatpush1.msra.mxu0 0.0
    %292 = vmatprep.subr.mxu0 0.0
    %293 = vmatpush1.msra.mxu0 0.0
    %294 = vmatprep.subr.mxu0 0.0
    %295 = vmatpush1.msra.mxu0 0.0
    %296 = vmatprep.subr.mxu0 0.0
    %297 = vmatpush1.msra.mxu0 0.0
    %298 = vmatprep.subr.mxu0 0.0
    %299 = vmatpush1.msra.mxu0 0.0
    %300 = vmatprep.subr.mxu0 0.0
    %301 = vmatpush1.msra.mxu0 0.0
    %302 = vmatprep.subr.mxu0 0.0
    %303 = vmatpush1.msra.mxu0 0.0
    %304 = vmatprep.subr.mxu0 0.0
    %305 = vmatpush1.msra.mxu0 0.0
    %306 = vmatprep.subr.mxu0 0.0
    %307 = vmatpush1.msra.mxu0 0.0
    %308 = vmatprep.subr.mxu0 0.0
    %309 = vmatpush1.msra.mxu0 0.0
    %310 = vmatprep.subr.mxu0 0.0
    %311 = vmatpush1.msra.mxu0 0.0
    %312 = vmatprep.subr.mxu0 0.0
    %313 = vmatpush1.msra.mxu0 0.0
    %314 = vmatprep.subr.mxu0 0.0
    %315 = vmatpush1.msra.mxu0 0.0
    %316 = vmatprep.subr.mxu0 0.0
    %317 = vmatpush1.msra.mxu0 0.0
    %318 = vmatprep.mubr.f32.mxu0 0.0
    %319 = vmatmul.mubr.f32.gmra.mrb[0].mxu0 %v243
    %v320 = vpop.f32.mrb[0].mxu0
    %v321 = vadd.f32 %v224, %v320
    %v322 = vpop.f32.mrb[0].mxu0
    %323 = vmatprep.mubr.f32.mxu0 0.0
    %324 = vmatmul.mubr.f32.gmra.mrb[0].mxu0 %v246
    %v325 = vpop.f32.mrb[0].mxu0
    %v326 = vadd.f32 %v229, %v325
    %v327 = vpop.f32.mrb[0].mxu0
    %328 = vmatprep.mubr.f32.mxu0 0.0
    %329 = vmatmul.mubr.f32.gmra.mrb[0].mxu0 %v249
    %v330 = vpop.f32.mrb[0].mxu0
    %v331 = vadd.f32 %v234, %v330
    %v332 = vpop.f32.mrb[0].mxu0
    %333 = vmatprep.mubr.f32.mxu0 0.0
    %334 = vmatmul.mubr.f32.gmra.mrb[0].mxu0 %v252
    %v335 = vpop.f32.mrb[0].mxu0
    %v336 = vadd.f32 %v239, %v335
    %v337 = vpop.f32.mrb[0].mxu0
    %338 = vdwg.mxu0
    %s339 = scalar_lea.vmem [#allocation5], 128
    %v340 = vld [vmem:[%s339] sm:$0xff]
    %v341 = vld [vmem:[%s339 + $0x8] sm:$0xff]
    %v342 = vld [vmem:[%s339 + $0x10] sm:$0xff]
    %v343 = vld [vmem:[%s339 + $0x18] sm:$0xff]
    %v344 = vld [vmem:[%s339 + $0x20] sm:$0xff]
    %v345 = vld [vmem:[%s339 + $0x28] sm:$0xff]
    %v346 = vld [vmem:[%s339 + $0x30] sm:$0xff]
    %v347 = vld [vmem:[%s339 + $0x38] sm:$0xff]
    %v349 = vsel %vm144, %v123, 0
    %v352 = vsel %vm144, %v124, 0
    %v355 = vsel %vm144, %v125, 0
    %v358 = vsel %vm144, %v126, 0
    %360 = vmatprep.subr.mxu0 0.0
    %361 = vmatpush1.msra.mxu0 %v340
    %362 = vmatprep.subr.mxu0 0.0
    %363 = vmatpush1.msra.mxu0 %v341
    %364 = vmatprep.subr.mxu0 0.0
    %365 = vmatpush1.msra.mxu0 %v342
    %366 = vmatprep.subr.mxu0 0.0
    %367 = vmatpush1.msra.mxu0 %v343
    %368 = vmatprep.subr.mxu0 0.0
    %369 = vmatpush1.msra.mxu0 %v344
    %370 = vmatprep.subr.mxu0 0.0
    %371 = vmatpush1.msra.mxu0 %v345
    %372 = vmatprep.subr.mxu0 0.0
    %373 = vmatpush1.msra.mxu0 %v346
    %374 = vmatprep.subr.mxu0 0.0
    %375 = vmatpush1.msra.mxu0 %v347
    %376 = vmatprep.subr.mxu0 0.0
    %377 = vmatpush1.msra.mxu0 0.0
    %378 = vmatprep.subr.mxu0 0.0
    %379 = vmatpush1.msra.mxu0 0.0
    %380 = vmatprep.subr.mxu0 0.0
    %381 = vmatpush1.msra.mxu0 0.0
    %382 = vmatprep.subr.mxu0 0.0
    %383 = vmatpush1.msra.mxu0 0.0
    %384 = vmatprep.subr.mxu0 0.0
    %385 = vmatpush1.msra.mxu0 0.0
    %386 = vmatprep.subr.mxu0 0.0
    %387 = vmatpush1.msra.mxu0 0.0
    %388 = vmatprep.subr.mxu0 0.0
    %389 = vmatpush1.msra.mxu0 0.0
    %390 = vmatprep.subr.mxu0 0.0
    %391 = vmatpush1.msra.mxu0 0.0
    %392 = vmatprep.subr.mxu0 0.0
    %393 = vmatpush1.msra.mxu0 0.0
    %394 = vmatprep.subr.mxu0 0.0
    %395 = vmatpush1.msra.mxu0 0.0
    %396 = vmatprep.subr.mxu0 0.0
    %397 = vmatpush1.msra.mxu0 0.0
    %398 = vmatprep.subr.mxu0 0.0
    %399 = vmatpush1.msra.mxu0 0.0
    %400 = vmatprep.subr.mxu0 0.0
    %401 = vmatpush1.msra.mxu0 0.0
    %402 = vmatprep.subr.mxu0 0.0
    %403 = vmatpush1.msra.mxu0 0.0
    %404 = vmatprep.subr.mxu0 0.0
    %405 = vmatpush1.msra.mxu0 0.0
    %406 = vmatprep.subr.mxu0 0.0
    %407 = vmatpush1.msra.mxu0 0.0
    %408 = vmatprep.subr.mxu0 0.0
    %409 = vmatpush1.msra.mxu0 0.0
    %410 = vmatprep.subr.mxu0 0.0
    %411 = vmatpush1.msra.mxu0 0.0
    %412 = vmatprep.subr.mxu0 0.0
    %413 = vmatpush1.msra.mxu0 0.0
    %414 = vmatprep.subr.mxu0 0.0
    %415 = vmatpush1.msra.mxu0 0.0
    %416 = vmatprep.subr.mxu0 0.0
    %417 = vmatpush1.msra.mxu0 0.0
    %418 = vmatprep.subr.mxu0 0.0
    %419 = vmatpush1.msra.mxu0 0.0
    %420 = vmatprep.subr.mxu0 0.0
    %421 = vmatpush1.msra.mxu0 0.0
    %422 = vmatprep.subr.mxu0 0.0
    %423 = vmatpush1.msra.mxu0 0.0
    %424 = vmatprep.mubr.f32.mxu0 0.0
    %425 = vmatmul.mubr.f32.gmra.mrb[0].mxu0 %v349
    %v426 = vpop.f32.mrb[0].mxu0
    %v427 = vadd.f32 0.0, %v426
    %v428 = vpop.f32.mrb[0].mxu0
    %429 = vmatprep.mubr.f32.mxu0 0.0
    %430 = vmatmul.mubr.f32.gmra.mrb[0].mxu0 %v352
    %v431 = vpop.f32.mrb[0].mxu0
    %v432 = vadd.f32 0.0, %v431
    %v433 = vpop.f32.mrb[0].mxu0
    %434 = vmatprep.mubr.f32.mxu0 0.0
    %435 = vmatmul.mubr.f32.gmra.mrb[0].mxu0 %v355
    %v436 = vpop.f32.mrb[0].mxu0
    %v437 = vadd.f32 0.0, %v436
    %v438 = vpop.f32.mrb[0].mxu0
    %439 = vmatprep.mubr.f32.mxu0 0.0
    %440 = vmatmul.mubr.f32.gmra.mrb[0].mxu0 %v358
    %v441 = vpop.f32.mrb[0].mxu0
    %v442 = vadd.f32 0.0, %v441
    %v443 = vpop.f32.mrb[0].mxu0
    %444 = vdwg.mxu0
    %v445 = vadd.f32 %v321, %v427
    %v446 = vadd.f32 %v326, %v432
    %v447 = vadd.f32 %v331, %v437
    %v448 = vadd.f32 %v336, %v442
    %v449 = vmax.f32 %v445, 0.0
    %v450 = vmax.f32 %v446, 0.0
    %v451 = vmax.f32 %v447, 0.0
    %v452 = vmax.f32 %v448, 0.0
    %453 = vst [vmem:[#allocation7] sm:$0xff] %v449
    %454 = vst [vmem:[#allocation7 + $0x8] sm:$0xff] %v450
    %455 = vst [vmem:[#allocation7 + $0x10] sm:$0xff] %v451
    %456 = vst [vmem:[#allocation7 + $0x18] sm:$0xff] %v452
    // Predicated region
    $region18: #{tpu_custom_call.1} parent=1 // pred_check
      _
    $region19: #{tpu_custom_call.1} parent=1 // pred_check_branch
      %458 = sbr.rel (0) target = $region21
    $region20: #{tpu_custom_call.1} parent=1 // pred_region
      %s460 = ssub.s32 512, 512
      %461 = vsyncadd [#allocation4], %s460
      %s462 = sshll.u32 [#allocation7], 4
      %s463 = int_to_ptr.vmem [resolvable:$true] %s462
      %468 = dma.vmem_to_hbm [thread:$0]  %s463, 512, %s2, [#allocation4], 128, 128, 8
    $region21: #{tpu_custom_call.1} parent=1 // pred_fallthru
      _
    // Predicated region
    $region22: #{tpu_custom_call.1} parent=1 // pred_check
      _
    $region23: #{tpu_custom_call.1} parent=1 // pred_check_branch
      %470 = sbr.rel (0) target = $region25
    $region24: #{tpu_custom_call.1} parent=1 // pred_region
      %471 = dma.done [#allocation4], 512
    $region25: #{tpu_custom_call.1} parent=1 // pred_fallthru
      _
    %472 = vsyncpa [#allocation3], 1
    %473 = vsyncpa [#allocation6], 1
    %474 = vsyncpa [#allocation4], 1

</llo_original>
